<compile_context>
chip_gen: v7x
topology: tpu7x:2x2x1
jax: 0.10.0
libtpu: 0.0.40
codegen_flags: <defaults>
</compile_context>

<pallas_src>
import numpy as np

import jax
import jax.numpy as jnp
from jax.experimental import pallas as pl
from jax.experimental.pallas import tpu as pltpu

S = 16       # signal_length (small stand-in for the real 1000)
DIMS = 4     # unused by the forward math (encoder trains one of `dims` candidates)
N = 1        # rows of X (torch decoder broadcasting requires N == 1)


def _round_up(x, m):
    return (x + m - 1) // m * m


def _vmem_limit_bytes():
    """Half of physical VMEM: ~64 MiB on v5e/v6e (128 MiB parts), ~32 MiB on v7x."""
    try:
        cap = pltpu.get_tpu_info().vmem_capacity_bytes
    except Exception:
        cap = 128 * 1024 * 1024
    return int(min(cap // 2, 96 * 1024 * 1024))


def ft_kernel(yp_ref, w1_ref, b1_ref, w2f_ref, out_ref):
    """One (core, hidden-tile) grid step of the streamed MLP reduction.

    yp_ref  [N, d2_pad]   resident encoder output (X @ Fc), streamed-weight dtype
    w1_ref  [d2_pad, TH]  streamed W1 tile (tile-major HBM layout)
    b1_ref  [1, TH]       streamed b1 tile (f32)
    w2f_ref [TH, s_pad]   streamed decoder-folded W2 tile
    out_ref [N, s_pad]    f32 partial-sum accumulator for this core
    """
    k = pl.program_id(1)                     # hidden-tile (reduction) axis, innermost

    @pl.when(k == 0)
    def _init():
        out_ref[...] = jnp.zeros_like(out_ref)

    # h1 tile + Sigmoid: streamed weights, f32 MXU accumulation, f32 sigmoid (EUP).
    h_pre = jnp.dot(yp_ref[...], w1_ref[...],
                    preferred_element_type=jnp.float32) + b1_ref[...]
    h = jax.nn.sigmoid(h_pre)                                        # [N, TH] f32

    # h2 + decoder (folded into W2f):  out += h @ W2f_tile
    out_ref[...] += jnp.dot(h.astype(w2f_ref.dtype), w2f_ref[...],
                            preferred_element_type=jnp.float32)


def make_ft_forward(fc, w1, b1, w2, b2, arg_vals, *,
                    weight_dtype=jnp.bfloat16, th_target=2048):
    """One-time weight preparation; returns a jitted per-call forward(x)."""
    s = fc.shape[0]
    d2 = 2 * s
    h_dim = w1.shape[1]                                    # 50*S
    assert w1.shape == (d2, h_dim) and w2.shape == (h_dim, d2)

    # ---- fold the decoder into the last linear layer (exact identity) ----
    cvec = jnp.sum(jnp.cos(arg_vals), axis=0, keepdims=True)   # [1, S]
    dvec = jnp.sum(jnp.sin(arg_vals), axis=0, keepdims=True)   # [1, S]
    w2f = (w2[:, :s] * cvec - w2[:, s:] * dvec) / s            # [50S, S]
    b2f = (b2[:, :s] * cvec - b2[:, s:] * dvec) / s            # [1, S]

    # ---- lane alignment + per-chip tile size ----
    s_pad = _round_up(s, 128)
    d2_pad = _round_up(d2, 128)
    vmem_limit = _vmem_limit_bytes()
    itemsize = np.dtype(weight_dtype).itemsize
    # largest TH whose double-buffered W1 + W2f tiles fit ~70% of the VMEM budget
    th_vmem = (int(vmem_limit * 0.7) // (2 * (d2_pad + s_pad) * itemsize)) // 128 * 128
    th = max(128, min(_round_up(h_dim, 128), int(th_target), th_vmem))
    h_pad = _round_up(h_dim, th)
    n_tiles = h_pad // th
    num_cores = 2 if (n_tiles >= 2 and n_tiles % 2 == 0) else 1
    tiles_per_core = n_tiles // num_cores

    # ---- zero-padded, tile-major weight layout (one contiguous DMA per tile) ----
    w1p = jnp.zeros((d2_pad, h_pad), weight_dtype).at[:d2, :h_dim].set(
        w1.astype(weight_dtype))
    w1t = jnp.transpose(w1p.reshape(d2_pad, n_tiles, th), (1, 0, 2))   # [n_tiles, d2_pad, TH]
    b1p = jnp.zeros((1, h_pad), jnp.float32).at[:, :h_dim].set(b1.astype(jnp.float32))
    b1t = b1p.reshape(n_tiles, 1, th)                                   # [n_tiles, 1, TH]
    w2fp = jnp.zeros((h_pad, s_pad), weight_dtype).at[:h_dim, :s].set(
        w2f.astype(weight_dtype))
    w2ft = w2fp.reshape(n_tiles, th, s_pad)                             # [n_tiles, TH, s_pad]
    b2f = b2f.astype(jnp.float32)                                       # [1, S], added outside
    fc = fc.astype(jnp.float32)

    kernel_call = pl.pallas_call(
        ft_kernel,
        out_shape=jax.ShapeDtypeStruct((num_cores, N, s_pad), jnp.float32),
        grid_spec=pltpu.PrefetchScalarGridSpec(
            num_scalar_prefetch=0,
            grid=(num_cores, tiles_per_core),
            in_specs=[
                pl.BlockSpec((N, d2_pad), lambda c, k: (0, 0)),           # y_pred (resident)
                pl.BlockSpec((None, d2_pad, th),
                             lambda c, k: (c * tiles_per_core + k, 0, 0)),  # W1 tile
                pl.BlockSpec((None, 1, th),
                             lambda c, k: (c * tiles_per_core + k, 0, 0)),  # b1 tile
                pl.BlockSpec((None, th, s_pad),
                             lambda c, k: (c * tiles_per_core + k, 0, 0)),  # W2f tile
            ],
            out_specs=pl.BlockSpec((None, N, s_pad), lambda c, k: (c, 0, 0)),
        ),
        compiler_params=pltpu.CompilerParams(
            dimension_semantics=("parallel", "arbitrary"),   # cores x hidden-reduction
            vmem_limit_bytes=vmem_limit,
        ),
    )

    @jax.jit
    def forward(x):
        assert x.shape == (N, s)
        # encoder forward (the converged matmul of ecoder()):  y_pred = X @ Fc  [N, 2S]
        y_pred = x.astype(jnp.float32) @ fc
        yp = jnp.zeros((N, d2_pad), weight_dtype).at[:, :d2].set(
            y_pred.astype(weight_dtype))
        partial = kernel_call(yp, w1t, b1t, w2ft)              # [num_cores, N, s_pad]
        return jnp.sum(partial, axis=0)[:, :s] + b2f           # [N, S]

    return forward


def ft_reference(x, fc, w1, b1, w2, b2, arg_vals):
    """Pure-JAX reference following the torch code verbatim (atan2 decoder)."""
    s = x.shape[1]
    y_pred = x @ fc
    h = jax.nn.sigmoid(y_pred @ w1 + b1)
    z = h @ w2 + b2
    y_real, y_imag = z[:, :s], z[:, s:]
    amplitudes = jnp.sqrt(y_real ** 2 + y_imag ** 2) / s
    phases = jnp.arctan2(y_imag, y_real)
    arg3 = arg_vals[None, :, :]                                   # [1, S, S]
    sinusoids = amplitudes[:, None, :] * jnp.cos(arg3 + phases[:, None, :])
    return jnp.sum(sinusoids, axis=1)                             # [1, S]


if __name__ == "__main__":
    key = jax.random.PRNGKey(0)
    k = jax.random.split(key, 7)

    # input signal
    x = jax.random.normal(k[0], (N, S), dtype=jnp.float32)

    # encoder matrix: np.random.random(...) - 0.5  -> U[-0.5, 0.5)
    fc = jax.random.uniform(k[1], (S, 2 * S), dtype=jnp.float32, minval=-0.5, maxval=0.5)

    # h1: Linear(2S, 50S), kaiming_uniform_ weight (bound = sqrt(6/fan_in)), default bias
    w1_bound = (6.0 / (2 * S)) ** 0.5
    b1_bound = 1.0 / (2 * S) ** 0.5
    w1 = jax.random.uniform(k[2], (2 * S, 50 * S), dtype=jnp.float32,
                            minval=-w1_bound, maxval=w1_bound)
    b1 = jax.random.uniform(k[3], (1, 50 * S), dtype=jnp.float32,
                            minval=-b1_bound, maxval=b1_bound)

    # h2: Linear(50S, 2S), default torch init (bound = 1/sqrt(fan_in))
    w2_bound = 1.0 / (50 * S) ** 0.5
    w2 = jax.random.uniform(k[4], (50 * S, 2 * S), dtype=jnp.float32,
                            minval=-w2_bound, maxval=w2_bound)
    b2 = jax.random.uniform(k[5], (1, 2 * S), dtype=jnp.float32,
                            minval=-w2_bound, maxval=w2_bound)

    # arg_vals = 2*pi * t * f / S
    t = jnp.arange(S, dtype=jnp.float32).reshape(-1, 1)
    f = jnp.arange(S, dtype=jnp.float32).reshape(1, -1)
    arg_vals = (2.0 * jnp.pi * t * f / S).astype(jnp.float32)

    # --- check 1: exact module semantics (integer t,f arg_vals), f32 weights so the
    #     kernel and the verbatim reference sit at the same quantization point ---
    fwd_f32 = make_ft_forward(fc, w1, b1, w2, b2, arg_vals, weight_dtype=jnp.float32)
    out = jax.block_until_ready(fwd_f32(x))
    ref = ft_reference(x, fc, w1, b1, w2, b2, arg_vals)
    assert out.shape == (N, S)
    assert jnp.allclose(out, ref, rtol=3e-2, atol=5e-3), (out, ref)

    # --- check 2: perturbed (non-degenerate) arg_vals so every output column carries
    #     real signal, exercising the decoder fold + streamed accumulation properly ---
    arg_pert = arg_vals + jax.random.uniform(k[6], (S, S), dtype=jnp.float32,
                                             minval=0.0, maxval=0.5)
    fwd_pert = make_ft_forward(fc, w1, b1, w2, b2, arg_pert, weight_dtype=jnp.float32)
    out_p = jax.block_until_ready(fwd_pert(x))
    ref_p = ft_reference(x, fc, w1, b1, w2, b2, arg_pert)
    assert jnp.allclose(out_p, ref_p, rtol=3e-2, atol=5e-3), (out_p, ref_p)

    # --- check 3: production config (bf16 streamed weights) smoke + loose accuracy ---
    fwd_bf16 = make_ft_forward(fc, w1, b1, w2, b2, arg_pert, weight_dtype=jnp.bfloat16)
    out_b = jax.block_until_ready(fwd_bf16(x))
    assert out_b.shape == (N, S)
    assert bool(jnp.all(jnp.isfinite(out_b)))
    assert jnp.allclose(out_b, ref_p, rtol=1e-1, atol=2e-2), (out_b, ref_p)

    print("KERNEL_OK")
</pallas_src>

<mosaic_0001>
module attributes {stable_mosaic.version = 11 : i64} {
  func.func @ft_kernel(%arg0: i32, %arg1: i32, %arg2: memref<1x128xf32, #tpu.memory_space<vmem>>, %arg3: memref<1x128x896xf32, #tpu.memory_space<vmem>>, %arg4: memref<1x1x896xf32, #tpu.memory_space<vmem>>, %arg5: memref<1x896x128xf32, #tpu.memory_space<vmem>>, %arg6: memref<1x1x128xf32, #tpu.memory_space<vmem>>) attributes {dimension_semantics = [#tpu.dimension_semantics<parallel>, #tpu.dimension_semantics<arbitrary>], iteration_bounds = array<i64: 1, 1>, scalar_prefetch = 0 : i64, scratch_operands = 0 : i64, tpu.core_type = #tpu.core_type<tc>, window_params = [{pipeline_mode = #tpu.pipeline_mode<synchronous>, transform_indices = @transform_0, window_bounds = array<i64: 1, 128>}, {transform_indices = @transform_1, window_bounds = array<i64: 1, 128, 896>}, {transform_indices = @transform_2, window_bounds = array<i64: 1, 1, 896>}, {transform_indices = @transform_3, window_bounds = array<i64: 1, 896, 128>}, {transform_indices = @transform_4, window_bounds = array<i64: 1, 1, 128>}]} {
    %c0_i32 = arith.constant 0 : i32
    %0 = arith.cmpi eq, %arg1, %c0_i32 : i32
    %1 = arith.extui %0 : i1 to i32
    %c0_i32_0 = arith.constant 0 : i32
    %2 = arith.cmpi ne, %1, %c0_i32_0 : i32
    scf.if %2 {
      %cst_19 = arith.constant 0.000000e+00 : f32
      %24 = vector.broadcast %cst_19 : f32 to vector<1x128xf32>
      %c0_20 = arith.constant 0 : index
      %c0_21 = arith.constant 0 : index
      %c0_22 = arith.constant 0 : index
      %25 = vector.load %arg6[%c0_20, %c0_21, %c0_22] : memref<1x1x128xf32, #tpu.memory_space<vmem>>, vector<1x1x128xf32>
      %26 = vector.shape_cast %25 : vector<1x1x128xf32> to vector<1x128xf32>
      %27 = vector.shape_cast %24 : vector<1x128xf32> to vector<1x1x128xf32>
      tpu.vector_store %arg6[%c0_20, %c0_21, %c0_22], %27 {strides = array<i32>} : memref<1x1x128xf32, #tpu.memory_space<vmem>>, vector<1x1x128xf32>,
    } else {
    }
    %c0 = arith.constant 0 : index
    %c0_1 = arith.constant 0 : index
    %3 = vector.load %arg2[%c0, %c0_1] : memref<1x128xf32, #tpu.memory_space<vmem>>, vector<1x128xf32>
    %c0_2 = arith.constant 0 : index
    %c0_3 = arith.constant 0 : index
    %c0_4 = arith.constant 0 : index
    %4 = vector.load %arg3[%c0_2, %c0_3, %c0_4] : memref<1x128x896xf32, #tpu.memory_space<vmem>>, vector<1x128x896xf32>
    %5 = vector.shape_cast %4 : vector<1x128x896xf32> to vector<128x896xf32>
    %cst = arith.constant dense<0.000000e+00> : vector<1x896xf32>
    %6 = tpu.matmul %3, %5, %cst {dimension_numbers = #tpu.dot_dimension_numbers<[1], [0], [0], [1], [0, 0, 1, 1], [], []>} : vector<1x128xf32>, vector<128x896xf32>, vector<1x896xf32> -> vector<1x896xf32>
    %c0_5 = arith.constant 0 : index
    %c0_6 = arith.constant 0 : index
    %c0_7 = arith.constant 0 : index
    %7 = vector.load %arg4[%c0_5, %c0_6, %c0_7] : memref<1x1x896xf32, #tpu.memory_space<vmem>>, vector<1x1x896xf32>
    %8 = vector.shape_cast %7 : vector<1x1x896xf32> to vector<1x896xf32>
    %9 = arith.addf %6, %8 : vector<1x896xf32>
    %10 = arith.negf %9 : vector<1x896xf32>
    %11 = math.exp %10 : vector<1x896xf32>
    %cst_8 = arith.constant 1.000000e+00 : f32
    %12 = vector.broadcast %cst_8 : f32 to vector<1x896xf32>
    %13 = arith.addf %12, %11 : vector<1x896xf32>
    %14 = arith.divf %12, %13 : vector<1x896xf32>
    %c0_9 = arith.constant 0 : index
    %c0_10 = arith.constant 0 : index
    %c0_11 = arith.constant 0 : index
    %15 = vector.load %arg6[%c0_9, %c0_10, %c0_11] : memref<1x1x128xf32, #tpu.memory_space<vmem>>, vector<1x1x128xf32>
    %16 = vector.shape_cast %15 : vector<1x1x128xf32> to vector<1x128xf32>
    %c0_12 = arith.constant 0 : index
    %c0_13 = arith.constant 0 : index
    %c0_14 = arith.constant 0 : index
    %17 = vector.load %arg5[%c0_12, %c0_13, %c0_14] : memref<1x896x128xf32, #tpu.memory_space<vmem>>, vector<1x896x128xf32>
    %18 = vector.shape_cast %17 : vector<1x896x128xf32> to vector<896x128xf32>
    %cst_15 = arith.constant dense<0.000000e+00> : vector<1x128xf32>
    %19 = tpu.matmul %14, %18, %cst_15 {dimension_numbers = #tpu.dot_dimension_numbers<[1], [0], [0], [1], [0, 0, 1, 1], [], []>} : vector<1x896xf32>, vector<896x128xf32>, vector<1x128xf32> -> vector<1x128xf32>
    %20 = arith.addf %16, %19 : vector<1x128xf32>
    %c0_16 = arith.constant 0 : index
    %c0_17 = arith.constant 0 : index
    %c0_18 = arith.constant 0 : index
    %21 = vector.load %arg6[%c0_16, %c0_17, %c0_18] : memref<1x1x128xf32, #tpu.memory_space<vmem>>, vector<1x1x128xf32>
    %22 = vector.shape_cast %21 : vector<1x1x128xf32> to vector<1x128xf32>
    %23 = vector.shape_cast %20 : vector<1x128xf32> to vector<1x1x128xf32>
    tpu.vector_store %arg6[%c0_16, %c0_17, %c0_18], %23 {strides = array<i32>} : memref<1x1x128xf32, #tpu.memory_space<vmem>>, vector<1x1x128xf32>,
    return
  }
  func.func @transform_0(%arg0: i32, %arg1: i32) -> (i32, i32) {
    %c0_i32 = arith.constant 0 : i32
    %c0_i32_0 = arith.constant 0 : i32
    %c0_i32_1 = arith.constant 0 : i32
    return %c0_i32, %c0_i32_0 : i32, i32
  }
  func.func @transform_1(%arg0: i32, %arg1: i32) -> (i32, i32, i32) {
    %c1_i32 = arith.constant 1 : i32
    %0 = arith.muli %arg0, %c1_i32 : i32
    %1 = arith.addi %0, %arg1 : i32
    %c0_i32 = arith.constant 0 : i32
    %c0_i32_0 = arith.constant 0 : i32
    %c0_i32_1 = arith.constant 0 : i32
    return %1, %c0_i32, %c0_i32_0 : i32, i32, i32
  }
  func.func @transform_2(%arg0: i32, %arg1: i32) -> (i32, i32, i32) {
    %c1_i32 = arith.constant 1 : i32
    %0 = arith.muli %arg0, %c1_i32 : i32
    %1 = arith.addi %0, %arg1 : i32
    %c0_i32 = arith.constant 0 : i32
    %c0_i32_0 = arith.constant 0 : i32
    %c0_i32_1 = arith.constant 0 : i32
    return %1, %c0_i32, %c0_i32_0 : i32, i32, i32
  }
  func.func @transform_3(%arg0: i32, %arg1: i32) -> (i32, i32, i32) {
    %c1_i32 = arith.constant 1 : i32
    %0 = arith.muli %arg0, %c1_i32 : i32
    %1 = arith.addi %0, %arg1 : i32
    %c0_i32 = arith.constant 0 : i32
    %c0_i32_0 = arith.constant 0 : i32
    %c0_i32_1 = arith.constant 0 : i32
    return %1, %c0_i32, %c0_i32_0 : i32, i32, i32
  }
  func.func @transform_4(%arg0: i32, %arg1: i32) -> (i32, i32, i32) {
    %c0_i32 = arith.constant 0 : i32
    %c0_i32_0 = arith.constant 0 : i32
    %c0_i32_1 = arith.constant 0 : i32
    return %arg0, %c0_i32, %c0_i32_0 : i32, i32, i32
  }
}

</mosaic_0001>

<llo_original>
// kernel: forward.1
$region0: #{forward.1}
  #allocation0 [shape = 'u32[]', space=smem, size = 0x4, offset = 0x4, fixed_abs, tag = 'smem constant byte address 0x4 - core index']
  #allocation1 [shape = 'u32[144,128]{1,0:T(1,128)}', space=vmem, size = 0x12000, scoped, tag = 'internal scratch']
  %s0 = inlined_call_operand.hbm [shape: f32[1,128], index: 0, kind: input, shape index: {}]
  %s1 = inlined_call_operand.hbm [shape: f32[1,128,896], index: 1, kind: input, shape index: {}]
  %s2 = inlined_call_operand.hbm [shape: f32[1,1,896], index: 2, kind: input, shape index: {}]
  %s3 = inlined_call_operand.hbm [shape: f32[1,896,128], index: 3, kind: input, shape index: {}]
  %s4 = inlined_call_operand.hbm [shape: f32[1,1,128], index: 4, kind: output, shape index: {}]
  %s5 = sld [smem:[#allocation0]]
  $region46: #{forward.1} parent=0
    _
  %s7 = ssub.s32 1, %s5
  %s8 = scalar_select 0, %s7, %s5
  $region1: #{forward.1} parent=0
    #allocation2 [shape = 'u8[512]{0}', space=vmem, size = 0x400, scoped, tag = 'input window, operand 0, single buffered']
    #allocation3 [shape = 's32[1]{0}', space=sflag, size = 0x4, scoped, tag = 'scoped memory for forward.1']
    #allocation4 [shape = 's32[1]{0}', space=sflag, size = 0x4, scoped, tag = 'scoped memory for forward.1']
    #allocation5 [shape = 'u8[458752]{0}', space=vmem, size = 0x70000, scoped, tag = 'input window, operand 1, single buffered']
    #allocation6 [shape = 's32[1]{0}', space=sflag, size = 0x4, scoped, tag = 'scoped memory for forward.1']
    #allocation7 [shape = 'u8[3584]{0}', space=vmem, size = 0x1000, scoped, tag = 'input window, operand 2, single buffered']
    #allocation8 [shape = 'u8[458752]{0}', space=vmem, size = 0x70000, scoped, tag = 'input window, operand 3, single buffered']
    #allocation9 [shape = 's32[1]{0}', space=sflag, size = 0x4, scoped, tag = 'scoped memory for forward.1']
    #allocation10 [shape = 'u8[512]{0}', space=vmem, size = 0x400, scoped, tag = 'output window, operand 0, single buffered']
    %9 = vsyncpa [#allocation3], 0
    %10 = vsyncpa [#allocation6], 0
    %11 = vsyncpa [#allocation9], 0
    %12 = vsyncpa [#allocation4], 0
    // Predicated region
    $region2: #{forward.1} parent=1 // pred_check
      _
    $region3: #{forward.1} parent=1 // pred_check_branch
      %14 = sbr.rel (0) target = $region5
    $region4: #{forward.1} parent=1 // pred_region
      %s16 = ssub.s32 16, 16
      %17 = vsyncadd [#allocation3], %s16
      %s19 = sshll.u32 [#allocation2], 4
      %s20 = int_to_ptr.vmem [resolvable:$true] %s19
      %22 = dma.hbm_to_vmem [thread:$0]  %s0, 16, %s20, [#allocation3]
    $region5: #{forward.1} parent=1 // pred_fallthru
      _
    // Predicated region
    $region6: #{forward.1} parent=1 // pred_check
      _
    $region7: #{forward.1} parent=1 // pred_check_branch
      %24 = sbr.rel (0) target = $region9
    $region8: #{forward.1} parent=1 // pred_region
      %s25 = sadd.s32 0, 0
      %s27 = ssub.s32 14336, 14336
      %28 = vsyncadd [#allocation6], %s27
      %s29 = smul.addr %s25, 112
      %s30 = smul.addr %s29, 128
      %s31 = scalar_lea.hbm %s1, %s30
      %s32 = sshll.u32 [#allocation5], 4
      %s33 = int_to_ptr.vmem [resolvable:$true] %s32
      %38 = dma.hbm_to_vmem [thread:$0]  %s31, 14336, %s33, [#allocation6], 896, 896, 56
    $region9: #{forward.1} parent=1 // pred_fallthru
      _
    // Predicated region
    $region10: #{forward.1} parent=1 // pred_check
      _
    $region11: #{forward.1} parent=1 // pred_check_branch
      %40 = sbr.rel (0) target = $region13
    $region12: #{forward.1} parent=1 // pred_region
      %s41 = sadd.s32 0, 0
      %s43 = ssub.s32 112, 112
      %44 = vsyncadd [#allocation6], %s43
      %s45 = smul.addr %s41, 7
      %s46 = smul.addr %s45, 16
      %s47 = scalar_lea.hbm %s2, %s46
      %s49 = sshll.u32 [#allocation7], 4
      %s50 = int_to_ptr.vmem [resolvable:$true] %s49
      %52 = dma.hbm_to_vmem [thread:$0]  %s47, 112, %s50, [#allocation6]
    $region13: #{forward.1} parent=1 // pred_fallthru
      _
    // Predicated region
    $region14: #{forward.1} parent=1 // pred_check
      _
    $region15: #{forward.1} parent=1 // pred_check_branch
      %54 = sbr.rel (0) target = $region17
    $region16: #{forward.1} parent=1 // pred_region
      %s55 = sadd.s32 0, 0
      %s57 = ssub.s32 14336, 14336
      %58 = vsyncadd [#allocation9], %s57
      %s59 = smul.addr %s55, 112
      %s60 = smul.addr %s59, 128
      %s61 = scalar_lea.hbm %s3, %s60
      %s62 = sshll.u32 [#allocation8], 4
      %s63 = int_to_ptr.vmem [resolvable:$true] %s62
      %68 = dma.hbm_to_vmem [thread:$0]  %s61, 14336, %s63, [#allocation9], 128, 128, 8
    $region17: #{forward.1} parent=1 // pred_fallthru
      _
    // Predicated region
    $region18: #{forward.1} parent=1 // pred_check
      _
    $region19: #{forward.1} parent=1 // pred_check_branch
      %70 = sbr.rel (0) target = $region21
    $region20: #{forward.1} parent=1 // pred_region
      %71 = dma.done [#allocation3], 16
    $region21: #{forward.1} parent=1 // pred_fallthru
      _
    // Predicated region
    $region22: #{forward.1} parent=1 // pred_check
      _
    $region23: #{forward.1} parent=1 // pred_check_branch
      %73 = sbr.rel (0) target = $region25
    $region24: #{forward.1} parent=1 // pred_region
      %74 = dma.done [#allocation6], 14336
    $region25: #{forward.1} parent=1 // pred_fallthru
      _
    // Predicated region
    $region26: #{forward.1} parent=1 // pred_check
      _
    $region27: #{forward.1} parent=1 // pred_check_branch
      %76 = sbr.rel (0) target = $region29
    $region28: #{forward.1} parent=1 // pred_region
      %77 = dma.done [#allocation6], 112
    $region29: #{forward.1} parent=1 // pred_fallthru
      _
    // Predicated region
    $region30: #{forward.1} parent=1 // pred_check
      _
    $region31: #{forward.1} parent=1 // pred_check_branch
      %79 = sbr.rel (0) target = $region33
    $region32: #{forward.1} parent=1 // pred_region
      %80 = dma.done [#allocation9], 14336
    $region33: #{forward.1} parent=1 // pred_fallthru
      _
    %s81 = sadd.s32 0, 0
    %s82 = sadd.s32 0, 0
    %s83 = sadd.s32 0, 0
    %p84 = scmp.eq.s32.totalorder 0, 0
    // Predicated region
    $region34: #{forward.1} parent=1 // pred_check
      %p85 = pneg %p84
    $region35: #{forward.1} parent=1 // pred_check_branch
      %87 = sbr.rel (%p85) target = $region37
    $region36: #{forward.1} parent=1 // pred_region
      %88 = vst [vmem:[#allocation10] sm:$0x1] 0.0
    $region37: #{forward.1} parent=1 // pred_fallthru
      _
    %v89 = vld [vmem:[#allocation2] sm:$0x1]
    %v90 = vld [vmem:[#allocation5] sm:$0xff]
    %v91 = vld [vmem:[#allocation5 + $0x8] sm:$0xff]
    %v92 = vld [vmem:[#allocation5 + $0x10] sm:$0xff]
    %v93 = vld [vmem:[#allocation5 + $0x18] sm:$0xff]
    %v94 = vld [vmem:[#allocation5 + $0x20] sm:$0xff]
    %v95 = vld [vmem:[#allocation5 + $0x28] sm:$0xff]
    %v96 = vld [vmem:[#allocation5 + $0x30] sm:$0xff]
    %v97 = vld [vmem:[#allocation5 + $0x38] sm:$0xff]
    %v98 = vld [vmem:[#allocation5 + $0x40] sm:$0xff]
    %v99 = vld [vmem:[#allocation5 + $0x48] sm:$0xff]
    %v100 = vld [vmem:[#allocation5 + $0x50] sm:$0xff]
    %v101 = vld [vmem:[#allocation5 + $0x58] sm:$0xff]
    %v102 = vld [vmem:[#allocation5 + $0x60] sm:$0xff]
    %v103 = vld [vmem:[#allocation5 + $0x68] sm:$0xff]
    %v104 = vld [vmem:[#allocation5 + $0x70] sm:$0xff]
    %v105 = vld [vmem:[#allocation5 + $0x78] sm:$0xff]
    %v106 = vld [vmem:[#allocation5 + $0x80] sm:$0xff]
    %v107 = vld [vmem:[#allocation5 + $0x88] sm:$0xff]
    %v108 = vld [vmem:[#allocation5 + $0x90] sm:$0xff]
    %v109 = vld [vmem:[#allocation5 + $0x98] sm:$0xff]
    %v110 = vld [vmem:[#allocation5 + $0xa0] sm:$0xff]
    %v111 = vld [vmem:[#allocation5 + $0xa8] sm:$0xff]
    %v112 = vld [vmem:[#allocation5 + $0xb0] sm:$0xff]
    %v113 = vld [vmem:[#allocation5 + $0xb8] sm:$0xff]
    %v114 = vld [vmem:[#allocation5 + $0xc0] sm:$0xff]
    %v115 = vld [vmem:[#allocation5 + $0xc8] sm:$0xff]
    %v116 = vld [vmem:[#allocation5 + $0xd0] sm:$0xff]
    %v117 = vld [vmem:[#allocation5 + $0xd8] sm:$0xff]
    %v118 = vld [vmem:[#allocation5 + $0xe0] sm:$0xff]
    %v119 = vld [vmem:[#allocation5 + $0xe8] sm:$0xff]
    %v120 = vld [vmem:[#allocation5 + $0xf0] sm:$0xff]
    %v121 = vld [vmem:[#allocation5 + $0xf8] sm:$0xff]
    %v122 = vld [vmem:[#allocation5 + $0x100] sm:$0xff]
    %v123 = vld [vmem:[#allocation5 + $0x108] sm:$0xff]
    %v124 = vld [vmem:[#allocation5 + $0x110] sm:$0xff]
    %v125 = vld [vmem:[#allocation5 + $0x118] sm:$0xff]
    %v126 = vld [vmem:[#allocation5 + $0x120] sm:$0xff]
    %v127 = vld [vmem:[#allocation5 + $0x128] sm:$0xff]
    %v128 = vld [vmem:[#allocation5 + $0x130] sm:$0xff]
    %v129 = vld [vmem:[#allocation5 + $0x138] sm:$0xff]
    %v130 = vld [vmem:[#allocation5 + $0x140] sm:$0xff]
    %v131 = vld [vmem:[#allocation5 + $0x148] sm:$0xff]
    %v132 = vld [vmem:[#allocation5 + $0x150] sm:$0xff]
    %v133 = vld [vmem:[#allocation5 + $0x158] sm:$0xff]
    %v134 = vld [vmem:[#allocation5 + $0x160] sm:$0xff]
    %v135 = vld [vmem:[#allocation5 + $0x168] sm:$0xff]
    %v136 = vld [vmem:[#allocation5 + $0x170] sm:$0xff]
    %v137 = vld [vmem:[#allocation5 + $0x178] sm:$0xff]
    %v138 = vld [vmem:[#allocation5 + $0x180] sm:$0xff]
    %v139 = vld [vmem:[#allocation5 + $0x188] sm:$0xff]
    %v140 = vld [vmem:[#allocation5 + $0x190] sm:$0xff]
    %v141 = vld [vmem:[#allocation5 + $0x198] sm:$0xff]
    %v142 = vld [vmem:[#allocation5 + $0x1a0] sm:$0xff]
    %v143 = vld [vmem:[#allocation5 + $0x1a8] sm:$0xff]
    %v144 = vld [vmem:[#allocation5 + $0x1b0] sm:$0xff]
    %v145 = vld [vmem:[#allocation5 + $0x1b8] sm:$0xff]
    %v146 = vld [vmem:[#allocation5 + $0x1c0] sm:$0xff]
    %v147 = vld [vmem:[#allocation5 + $0x1c8] sm:$0xff]
    %v148 = vld [vmem:[#allocation5 + $0x1d0] sm:$0xff]
    %v149 = vld [vmem:[#allocation5 + $0x1d8] sm:$0xff]
    %v150 = vld [vmem:[#allocation5 + $0x1e0] sm:$0xff]
    %v151 = vld [vmem:[#allocation5 + $0x1e8] sm:$0xff]
    %v152 = vld [vmem:[#allocation5 + $0x1f0] sm:$0xff]
    %v153 = vld [vmem:[#allocation5 + $0x1f8] sm:$0xff]
    %v154 = vld [vmem:[#allocation5 + $0x200] sm:$0xff]
    %v155 = vld [vmem:[#allocation5 + $0x208] sm:$0xff]
    %v156 = vld [vmem:[#allocation5 + $0x210] sm:$0xff]
    %v157 = vld [vmem:[#allocation5 + $0x218] sm:$0xff]
    %v158 = vld [vmem:[#allocation5 + $0x220] sm:$0xff]
    %v159 = vld [vmem:[#allocation5 + $0x228] sm:$0xff]
    %v160 = vld [vmem:[#allocation5 + $0x230] sm:$0xff]
    %v161 = vld [vmem:[#allocation5 + $0x238] sm:$0xff]
    %v162 = vld [vmem:[#allocation5 + $0x240] sm:$0xff]
    %v163 = vld [vmem:[#allocation5 + $0x248] sm:$0xff]
    %v164 = vld [vmem:[#allocation5 + $0x250] sm:$0xff]
    %v165 = vld [vmem:[#allocation5 + $0x258] sm:$0xff]
    %v166 = vld [vmem:[#allocation5 + $0x260] sm:$0xff]
    %v167 = vld [vmem:[#allocation5 + $0x268] sm:$0xff]
    %v168 = vld [vmem:[#allocation5 + $0x270] sm:$0xff]
    %v169 = vld [vmem:[#allocation5 + $0x278] sm:$0xff]
    %v170 = vld [vmem:[#allocation5 + $0x280] sm:$0xff]
    %v171 = vld [vmem:[#allocation5 + $0x288] sm:$0xff]
    %v172 = vld [vmem:[#allocation5 + $0x290] sm:$0xff]
    %v173 = vld [vmem:[#allocation5 + $0x298] sm:$0xff]
    %v174 = vld [vmem:[#allocation5 + $0x2a0] sm:$0xff]
    %v175 = vld [vmem:[#allocation5 + $0x2a8] sm:$0xff]
    %v176 = vld [vmem:[#allocation5 + $0x2b0] sm:$0xff]
    %v177 = vld [vmem:[#allocation5 + $0x2b8] sm:$0xff]
    %v178 = vld [vmem:[#allocation5 + $0x2c0] sm:$0xff]
    %v179 = vld [vmem:[#allocation5 + $0x2c8] sm:$0xff]
    %v180 = vld [vmem:[#allocation5 + $0x2d0] sm:$0xff]
    %v181 = vld [vmem:[#allocation5 + $0x2d8] sm:$0xff]
    %v182 = vld [vmem:[#allocation5 + $0x2e0] sm:$0xff]
    %v183 = vld [vmem:[#allocation5 + $0x2e8] sm:$0xff]
    %v184 = vld [vmem:[#allocation5 + $0x2f0] sm:$0xff]
    %v185 = vld [vmem:[#allocation5 + $0x2f8] sm:$0xff]
    %v186 = vld [vmem:[#allocation5 + $0x300] sm:$0xff]
    %v187 = vld [vmem:[#allocation5 + $0x308] sm:$0xff]
    %v188 = vld [vmem:[#allocation5 + $0x310] sm:$0xff]
    %v189 = vld [vmem:[#allocation5 + $0x318] sm:$0xff]
    %v190 = vld [vmem:[#allocation5 + $0x320] sm:$0xff]
    %v191 = vld [vmem:[#allocation5 + $0x328] sm:$0xff]
    %v192 = vld [vmem:[#allocation5 + $0x330] sm:$0xff]
    %v193 = vld [vmem:[#allocation5 + $0x338] sm:$0xff]
    %v194 = vld [vmem:[#allocation5 + $0x340] sm:$0xff]
    %v195 = vld [vmem:[#allocation5 + $0x348] sm:$0xff]
    %v196 = vld [vmem:[#allocation5 + $0x350] sm:$0xff]
    %v197 = vld [vmem:[#allocation5 + $0x358] sm:$0xff]
    %v198 = vld [vmem:[#allocation5 + $0x360] sm:$0xff]
    %v199 = vld [vmem:[#allocation5 + $0x368] sm:$0xff]
    %v200 = vld [vmem:[#allocation5 + $0x370] sm:$0xff]
    %v201 = vld [vmem:[#allocation5 + $0x378] sm:$0xff]
    %v202 = vld [vmem:[#allocation7] sm:$0xff]
    %v204 = vlaneseq
    %v205 = vshrl.u32 %v204, 7
    %v206 = vsub.s32 0, %v205
    %v207 = vrot.slane %v202, %v206
    %v208 = vlaneseq
    %v209 = vshrl.u32 %v208, 7
    %v210 = vsub.s32 1, %v209
    %v211 = vrot.slane %v202, %v210
    %v212 = vlaneseq
    %v213 = vshrl.u32 %v212, 7
    %v214 = vsub.s32 2, %v213
    %v215 = vrot.slane %v202, %v214
    %v216 = vlaneseq
    %v217 = vshrl.u32 %v216, 7
    %v218 = vsub.s32 3, %v217
    %v219 = vrot.slane %v202, %v218
    %v220 = vlaneseq
    %v221 = vshrl.u32 %v220, 7
    %v222 = vsub.s32 4, %v221
    %v223 = vrot.slane %v202, %v222
    %v224 = vlaneseq
    %v225 = vshrl.u32 %v224, 7
    %v226 = vsub.s32 5, %v225
    %v227 = vrot.slane %v202, %v226
    %v228 = vlaneseq
    %v229 = vshrl.u32 %v228, 7
    %v230 = vsub.s32 6, %v229
    %v231 = vrot.slane %v202, %v230
    %239 = vmatprep.subr.mxu0 %v91
    %240 = vmatpush1.msra.mxu0 %v90
    %241 = vmatprep.subr.mxu0 %v98
    %242 = vmatpush1.msra.mxu0 %v97
    %243 = vmatprep.subr.mxu0 %v105
    %244 = vmatpush1.msra.mxu0 %v104
    %245 = vmatprep.subr.mxu0 %v112
    %246 = vmatpush1.msra.mxu0 %v111
    %247 = vmatprep.subr.mxu0 %v119
    %248 = vmatpush1.msra.mxu0 %v118
    %249 = vmatprep.subr.mxu0 %v126
    %250 = vmatpush1.msra.mxu0 %v125
    %251 = vmatprep.subr.mxu0 %v133
    %252 = vmatpush1.msra.mxu0 %v132
    %253 = vmatprep.subr.mxu0 %v140
    %254 = vmatpush1.msra.mxu0 %v139
    %255 = vmatprep.subr.mxu0 %v147
    %256 = vmatpush1.msra.mxu0 %v146
    %257 = vmatprep.subr.mxu0 %v154
    %258 = vmatpush1.msra.mxu0 %v153
    %259 = vmatprep.subr.mxu0 %v161
    %260 = vmatpush1.msra.mxu0 %v160
    %261 = vmatprep.subr.mxu0 %v168
    %262 = vmatpush1.msra.mxu0 %v167
    %263 = vmatprep.subr.mxu0 %v175
    %264 = vmatpush1.msra.mxu0 %v174
    %265 = vmatprep.subr.mxu0 %v182
    %266 = vmatpush1.msra.mxu0 %v181
    %267 = vmatprep.subr.mxu0 %v189
    %268 = vmatpush1.msra.mxu0 %v188
    %269 = vmatprep.subr.mxu0 %v196
    %270 = vmatpush1.msra.mxu0 %v195
    %271 = vmatprep.subr.mxu0 0.0
    %272 = vmatpush1.msra.mxu0 0.0
    %273 = vmatprep.subr.mxu0 0.0
    %274 = vmatpush1.msra.mxu0 0.0
    %275 = vmatprep.subr.mxu0 0.0
    %276 = vmatpush1.msra.mxu0 0.0
    %277 = vmatprep.subr.mxu0 0.0
    %278 = vmatpush1.msra.mxu0 0.0
    %279 = vmatprep.subr.mxu0 0.0
    %280 = vmatpush1.msra.mxu0 0.0
    %281 = vmatprep.subr.mxu0 0.0
    %282 = vmatpush1.msra.mxu0 0.0
    %283 = vmatprep.subr.mxu0 0.0
    %284 = vmatpush1.msra.mxu0 0.0
    %285 = vmatprep.subr.mxu0 0.0
    %286 = vmatpush1.msra.mxu0 0.0
    %287 = vmatprep.subr.mxu0 0.0
    %288 = vmatpush1.msra.mxu0 0.0
    %289 = vmatprep.subr.mxu0 0.0
    %290 = vmatpush1.msra.mxu0 0.0
    %291 = vmatprep.subr.mxu0 0.0
    %292 = vmatpush1.msra.mxu0 0.0
    %293 = vmatprep.subr.mxu0 0.0
    %294 = vmatpush1.msra.mxu0 0.0
    %295 = vmatprep.subr.mxu0 0.0
    %296 = vmatpush1.msra.mxu0 0.0
    %297 = vmatprep.subr.mxu0 0.0
    %298 = vmatpush1.msra.mxu0 0.0
    %299 = vmatprep.subr.mxu0 0.0
    %300 = vmatpush1.msra.mxu0 0.0
    %301 = vmatprep.subr.mxu0 0.0
    %302 = vmatpush1.msra.mxu0 0.0
    %303 = vmatprep.mubr.f32.mxu0 0.0
    %304 = vmatmul.mubr.f32.gmra.mrb[0].mxu0 %v89
    %v305 = vpop.f32.mrb[0].mxu0
    %v306 = vadd.f32 %v207, %v305
    %v307 = vpop.f32.mrb[0].mxu0
    %v308 = vadd.f32 %v211, %v307
    %309 = vdwg.mxu0
    %310 = vmatprep.subr.mxu0 %v93
    %311 = vmatpush1.msra.mxu0 %v92
    %312 = vmatprep.subr.mxu0 %v100
    %313 = vmatpush1.msra.mxu0 %v99
    %314 = vmatprep.subr.mxu0 %v107
    %315 = vmatpush1.msra.mxu0 %v106
    %316 = vmatprep.subr.mxu0 %v114
    %317 = vmatpush1.msra.mxu0 %v113
    %318 = vmatprep.subr.mxu0 %v121
    %319 = vmatpush1.msra.mxu0 %v120
    %320 = vmatprep.subr.mxu0 %v128
    %321 = vmatpush1.msra.mxu0 %v127
    %322 = vmatprep.subr.mxu0 %v135
    %323 = vmatpush1.msra.mxu0 %v134
    %324 = vmatprep.subr.mxu0 %v142
    %325 = vmatpush1.msra.mxu0 %v141
    %326 = vmatprep.subr.mxu0 %v149
    %327 = vmatpush1.msra.mxu0 %v148
    %328 = vmatprep.subr.mxu0 %v156
    %329 = vmatpush1.msra.mxu0 %v155
    %330 = vmatprep.subr.mxu0 %v163
    %331 = vmatpush1.msra.mxu0 %v162
    %332 = vmatprep.subr.mxu0 %v170
    %333 = vmatpush1.msra.mxu0 %v169
    %334 = vmatprep.subr.mxu0 %v177
    %335 = vmatpush1.msra.mxu0 %v176
    %336 = vmatprep.subr.mxu0 %v184
    %337 = vmatpush1.msra.mxu0 %v183
    %338 = vmatprep.subr.mxu0 %v191
    %339 = vmatpush1.msra.mxu0 %v190
    %340 = vmatprep.subr.mxu0 %v198
    %341 = vmatpush1.msra.mxu0 %v197
    %342 = vmatprep.subr.mxu0 0.0
    %343 = vmatpush1.msra.mxu0 0.0
    %344 = vmatprep.subr.mxu0 0.0
    %345 = vmatpush1.msra.mxu0 0.0
    %346 = vmatprep.subr.mxu0 0.0
    %347 = vmatpush1.msra.mxu0 0.0
    %348 = vmatprep.subr.mxu0 0.0
    %349 = vmatpush1.msra.mxu0 0.0
    %350 = vmatprep.subr.mxu0 0.0
    %351 = vmatpush1.msra.mxu0 0.0
    %352 = vmatprep.subr.mxu0 0.0
    %353 = vmatpush1.msra.mxu0 0.0
    %354 = vmatprep.subr.mxu0 0.0
    %355 = vmatpush1.msra.mxu0 0.0
    %356 = vmatprep.subr.mxu0 0.0
    %357 = vmatpush1.msra.mxu0 0.0
    %358 = vmatprep.subr.mxu0 0.0
    %359 = vmatpush1.msra.mxu0 0.0
    %360 = vmatprep.subr.mxu0 0.0
    %361 = vmatpush1.msra.mxu0 0.0
    %362 = vmatprep.subr.mxu0 0.0
    %363 = vmatpush1.msra.mxu0 0.0
    %364 = vmatprep.subr.mxu0 0.0
    %365 = vmatpush1.msra.mxu0 0.0
    %366 = vmatprep.subr.mxu0 0.0
    %367 = vmatpush1.msra.mxu0 0.0
    %368 = vmatprep.subr.mxu0 0.0
    %369 = vmatpush1.msra.mxu0 0.0
    %370 = vmatprep.subr.mxu0 0.0
    %371 = vmatpush1.msra.mxu0 0.0
    %372 = vmatprep.subr.mxu0 0.0
    %373 = vmatpush1.msra.mxu0 0.0
    %374 = vmatprep.mubr.f32.mxu0 0.0
    %375 = vmatmul.mubr.f32.gmra.mrb[0].mxu0 %v89
    %v376 = vpop.f32.mrb[0].mxu0
    %v377 = vadd.f32 %v215, %v376
    %v378 = vpop.f32.mrb[0].mxu0
    %v379 = vadd.f32 %v219, %v378
    %380 = vdwg.mxu0
    %381 = vmatprep.subr.mxu0 %v95
    %382 = vmatpush1.msra.mxu0 %v94
    %383 = vmatprep.subr.mxu0 %v102
    %384 = vmatpush1.msra.mxu0 %v101
    %385 = vmatprep.subr.mxu0 %v109
    %386 = vmatpush1.msra.mxu0 %v108
    %387 = vmatprep.subr.mxu0 %v116
    %388 = vmatpush1.msra.mxu0 %v115
    %389 = vmatprep.subr.mxu0 %v123
    %390 = vmatpush1.msra.mxu0 %v122
    %391 = vmatprep.subr.mxu0 %v130
    %392 = vmatpush1.msra.mxu0 %v129
    %393 = vmatprep.subr.mxu0 %v137
    %394 = vmatpush1.msra.mxu0 %v136
    %395 = vmatprep.subr.mxu0 %v144
    %396 = vmatpush1.msra.mxu0 %v143
    %397 = vmatprep.subr.mxu0 %v151
    %398 = vmatpush1.msra.mxu0 %v150
    %399 = vmatprep.subr.mxu0 %v158
    %400 = vmatpush1.msra.mxu0 %v157
    %401 = vmatprep.subr.mxu0 %v165
    %402 = vmatpush1.msra.mxu0 %v164
    %403 = vmatprep.subr.mxu0 %v172
    %404 = vmatpush1.msra.mxu0 %v171
    %405 = vmatprep.subr.mxu0 %v179
    %406 = vmatpush1.msra.mxu0 %v178
    %407 = vmatprep.subr.mxu0 %v186
    %408 = vmatpush1.msra.mxu0 %v185
    %409 = vmatprep.subr.mxu0 %v193
    %410 = vmatpush1.msra.mxu0 %v192
    %411 = vmatprep.subr.mxu0 %v200
    %412 = vmatpush1.msra.mxu0 %v199
    %413 = vmatprep.subr.mxu0 0.0
    %414 = vmatpush1.msra.mxu0 0.0
    %415 = vmatprep.subr.mxu0 0.0
    %416 = vmatpush1.msra.mxu0 0.0
    %417 = vmatprep.subr.mxu0 0.0
    %418 = vmatpush1.msra.mxu0 0.0
    %419 = vmatprep.subr.mxu0 0.0
    %420 = vmatpush1.msra.mxu0 0.0
    %421 = vmatprep.subr.mxu0 0.0
    %422 = vmatpush1.msra.mxu0 0.0
    %423 = vmatprep.subr.mxu0 0.0
    %424 = vmatpush1.msra.mxu0 0.0
    %425 = vmatprep.subr.mxu0 0.0
    %426 = vmatpush1.msra.mxu0 0.0
    %427 = vmatprep.subr.mxu0 0.0
    %428 = vmatpush1.msra.mxu0 0.0
    %429 = vmatprep.subr.mxu0 0.0
    %430 = vmatpush1.msra.mxu0 0.0
    %431 = vmatprep.subr.mxu0 0.0
    %432 = vmatpush1.msra.mxu0 0.0
    %433 = vmatprep.subr.mxu0 0.0
    %434 = vmatpush1.msra.mxu0 0.0
    %435 = vmatprep.subr.mxu0 0.0
    %436 = vmatpush1.msra.mxu0 0.0
    %437 = vmatprep.subr.mxu0 0.0
    %438 = vmatpush1.msra.mxu0 0.0
    %439 = vmatprep.subr.mxu0 0.0
    %440 = vmatpush1.msra.mxu0 0.0
    %441 = vmatprep.subr.mxu0 0.0
    %442 = vmatpush1.msra.mxu0 0.0
    %443 = vmatprep.subr.mxu0 0.0
    %444 = vmatpush1.msra.mxu0 0.0
    %445 = vmatprep.mubr.f32.mxu0 0.0
    %446 = vmatmul.mubr.f32.gmra.mrb[0].mxu0 %v89
    %v447 = vpop.f32.mrb[0].mxu0
    %v448 = vadd.f32 %v223, %v447
    %v449 = vpop.f32.mrb[0].mxu0
    %v450 = vadd.f32 %v227, %v449
    %451 = vdwg.mxu0
    %452 = vmatprep.subr.mxu0 0.0
    %453 = vmatpush1.msra.mxu0 %v96
    %454 = vmatprep.subr.mxu0 0.0
    %455 = vmatpush1.msra.mxu0 %v103
    %456 = vmatprep.subr.mxu0 0.0
    %457 = vmatpush1.msra.mxu0 %v110
    %458 = vmatprep.subr.mxu0 0.0
    %459 = vmatpush1.msra.mxu0 %v117
    %460 = vmatprep.subr.mxu0 0.0
    %461 = vmatpush1.msra.mxu0 %v124
    %462 = vmatprep.subr.mxu0 0.0
    %463 = vmatpush1.msra.mxu0 %v131
    %464 = vmatprep.subr.mxu0 0.0
    %465 = vmatpush1.msra.mxu0 %v138
    %466 = vmatprep.subr.mxu0 0.0
    %467 = vmatpush1.msra.mxu0 %v145
    %468 = vmatprep.subr.mxu0 0.0
    %469 = vmatpush1.msra.mxu0 %v152
    %470 = vmatprep.subr.mxu0 0.0
    %471 = vmatpush1.msra.mxu0 %v159
    %472 = vmatprep.subr.mxu0 0.0
    %473 = vmatpush1.msra.mxu0 %v166
    %474 = vmatprep.subr.mxu0 0.0
    %475 = vmatpush1.msra.mxu0 %v173
    %476 = vmatprep.subr.mxu0 0.0
    %477 = vmatpush1.msra.mxu0 %v180
    %478 = vmatprep.subr.mxu0 0.0
    %479 = vmatpush1.msra.mxu0 %v187
    %480 = vmatprep.subr.mxu0 0.0
    %481 = vmatpush1.msra.mxu0 %v194
    %482 = vmatprep.subr.mxu0 0.0
    %483 = vmatpush1.msra.mxu0 %v201
    %484 = vmatprep.subr.mxu0 0.0
    %485 = vmatpush1.msra.mxu0 0.0
    %486 = vmatprep.subr.mxu0 0.0
    %487 = vmatpush1.msra.mxu0 0.0
    %488 = vmatprep.subr.mxu0 0.0
    %489 = vmatpush1.msra.mxu0 0.0
    %490 = vmatprep.subr.mxu0 0.0
    %491 = vmatpush1.msra.mxu0 0.0
    %492 = vmatprep.subr.mxu0 0.0
    %493 = vmatpush1.msra.mxu0 0.0
    %494 = vmatprep.subr.mxu0 0.0
    %495 = vmatpush1.msra.mxu0 0.0
    %496 = vmatprep.subr.mxu0 0.0
    %497 = vmatpush1.msra.mxu0 0.0
    %498 = vmatprep.subr.mxu0 0.0
    %499 = vmatpush1.msra.mxu0 0.0
    %500 = vmatprep.subr.mxu0 0.0
    %501 = vmatpush1.msra.mxu0 0.0
    %502 = vmatprep.subr.mxu0 0.0
    %503 = vmatpush1.msra.mxu0 0.0
    %504 = vmatprep.subr.mxu0 0.0
    %505 = vmatpush1.msra.mxu0 0.0
    %506 = vmatprep.subr.mxu0 0.0
    %507 = vmatpush1.msra.mxu0 0.0
    %508 = vmatprep.subr.mxu0 0.0
    %509 = vmatpush1.msra.mxu0 0.0
    %510 = vmatprep.subr.mxu0 0.0
    %511 = vmatpush1.msra.mxu0 0.0
    %512 = vmatprep.subr.mxu0 0.0
    %513 = vmatpush1.msra.mxu0 0.0
    %514 = vmatprep.subr.mxu0 0.0
    %515 = vmatpush1.msra.mxu0 0.0
    %516 = vmatprep.mubr.f32.mxu0 0.0
    %517 = vmatmul.mubr.f32.gmra.mrb[0].mxu0 %v89
    %v518 = vpop.f32.mrb[0].mxu0
    %v519 = vadd.f32 %v231, %v518
    %v520 = vpop.f32.mrb[0].mxu0
    %521 = vdwg.mxu0
    %v522 = vxor.u32 %v306, 2147483648
    %v523 = vxor.u32 %v308, 2147483648
    %v524 = vxor.u32 %v377, 2147483648
    %v525 = vxor.u32 %v379, 2147483648
    %v526 = vxor.u32 %v448, 2147483648
    %v527 = vxor.u32 %v450, 2147483648
    %v528 = vxor.u32 %v519, 2147483648
    %v529 = vmul.f32 %v522, 1.442695
    %v530 = vpow.pop %v529
    %v531 = vmul.f32 %v523, 1.442695
    %v532 = vpow.pop %v531
    %v533 = vmul.f32 %v524, 1.442695
    %v534 = vpow.pop %v533
    %v535 = vmul.f32 %v525, 1.442695
    %v536 = vpow.pop %v535
    %v537 = vmul.f32 %v526, 1.442695
    %v538 = vpow.pop %v537
    %v539 = vmul.f32 %v527, 1.442695
    %v540 = vpow.pop %v539
    %v541 = vmul.f32 %v528, 1.442695
    %v542 = vpow.pop %v541
    %v543 = vadd.f32 %v530, 1.0
    %v544 = vadd.f32 %v532, 1.0
    %v545 = vadd.f32 %v534, 1.0
    %v546 = vadd.f32 %v536, 1.0
    %v547 = vadd.f32 %v538, 1.0
    %v548 = vadd.f32 %v540, 1.0
    %v549 = vadd.f32 %v542, 1.0
    %v550 = vrcp.pop %v543
    %v551 = vmul.f32 1.0, %v550
    %v552 = vrcp.pop %v544
    %v553 = vmul.f32 1.0, %v552
    %v554 = vrcp.pop %v545
    %v555 = vmul.f32 1.0, %v554
    %v556 = vrcp.pop %v546
    %v557 = vmul.f32 1.0, %v556
    %v558 = vrcp.pop %v547
    %v559 = vmul.f32 1.0, %v558
    %v560 = vrcp.pop %v548
    %v561 = vmul.f32 1.0, %v560
    %v562 = vrcp.pop %v549
    %v563 = vmul.f32 1.0, %v562
    %v564 = vld [vmem:[#allocation10] sm:$0x1]
    %v565 = vld [vmem:[#allocation8] sm:$0xff]
    %v566 = vld [vmem:[#allocation8 + $0x8] sm:$0xff]
    %v567 = vld [vmem:[#allocation8 + $0x10] sm:$0xff]
    %v568 = vld [vmem:[#allocation8 + $0x18] sm:$0xff]
    %v569 = vld [vmem:[#allocation8 + $0x20] sm:$0xff]
    %v570 = vld [vmem:[#allocation8 + $0x28] sm:$0xff]
    %v571 = vld [vmem:[#allocation8 + $0x30] sm:$0xff]
    %v572 = vld [vmem:[#allocation8 + $0x38] sm:$0xff]
    %v573 = vld [vmem:[#allocation8 + $0x40] sm:$0xff]
    %v574 = vld [vmem:[#allocation8 + $0x48] sm:$0xff]
    %v575 = vld [vmem:[#allocation8 + $0x50] sm:$0xff]
    %v576 = vld [vmem:[#allocation8 + $0x58] sm:$0xff]
    %v577 = vld [vmem:[#allocation8 + $0x60] sm:$0xff]
    %v578 = vld [vmem:[#allocation8 + $0x68] sm:$0xff]
    %v579 = vld [vmem:[#allocation8 + $0x70] sm:$0xff]
    %v580 = vld [vmem:[#allocation8 + $0x78] sm:$0xff]
    %v581 = vld [vmem:[#allocation8 + $0x80] sm:$0xff]
    %v582 = vld [vmem:[#allocation8 + $0x88] sm:$0xff]
    %v583 = vld [vmem:[#allocation8 + $0x90] sm:$0xff]
    %v584 = vld [vmem:[#allocation8 + $0x98] sm:$0xff]
    %v585 = vld [vmem:[#allocation8 + $0xa0] sm:$0xff]
    %v586 = vld [vmem:[#allocation8 + $0xa8] sm:$0xff]
    %v587 = vld [vmem:[#allocation8 + $0xb0] sm:$0xff]
    %v588 = vld [vmem:[#allocation8 + $0xb8] sm:$0xff]
    %v589 = vld [vmem:[#allocation8 + $0xc0] sm:$0xff]
    %v590 = vld [vmem:[#allocation8 + $0xc8] sm:$0xff]
    %v591 = vld [vmem:[#allocation8 + $0xd0] sm:$0xff]
    %v592 = vld [vmem:[#allocation8 + $0xd8] sm:$0xff]
    %v593 = vld [vmem:[#allocation8 + $0xe0] sm:$0xff]
    %v594 = vld [vmem:[#allocation8 + $0xe8] sm:$0xff]
    %v595 = vld [vmem:[#allocation8 + $0xf0] sm:$0xff]
    %v596 = vld [vmem:[#allocation8 + $0xf8] sm:$0xff]
    %v597 = vld [vmem:[#allocation8 + $0x100] sm:$0xff]
    %v598 = vld [vmem:[#allocation8 + $0x108] sm:$0xff]
    %v599 = vld [vmem:[#allocation8 + $0x110] sm:$0xff]
    %v600 = vld [vmem:[#allocation8 + $0x118] sm:$0xff]
    %v601 = vld [vmem:[#allocation8 + $0x120] sm:$0xff]
    %v602 = vld [vmem:[#allocation8 + $0x128] sm:$0xff]
    %v603 = vld [vmem:[#allocation8 + $0x130] sm:$0xff]
    %v604 = vld [vmem:[#allocation8 + $0x138] sm:$0xff]
    %v605 = vld [vmem:[#allocation8 + $0x140] sm:$0xff]
    %v606 = vld [vmem:[#allocation8 + $0x148] sm:$0xff]
    %v607 = vld [vmem:[#allocation8 + $0x150] sm:$0xff]
    %v608 = vld [vmem:[#allocation8 + $0x158] sm:$0xff]
    %v609 = vld [vmem:[#allocation8 + $0x160] sm:$0xff]
    %v610 = vld [vmem:[#allocation8 + $0x168] sm:$0xff]
    %v611 = vld [vmem:[#allocation8 + $0x170] sm:$0xff]
    %v612 = vld [vmem:[#allocation8 + $0x178] sm:$0xff]
    %v613 = vld [vmem:[#allocation8 + $0x180] sm:$0xff]
    %v614 = vld [vmem:[#allocation8 + $0x188] sm:$0xff]
    %v615 = vld [vmem:[#allocation8 + $0x190] sm:$0xff]
    %v616 = vld [vmem:[#allocation8 + $0x198] sm:$0xff]
    %v617 = vld [vmem:[#allocation8 + $0x1a0] sm:$0xff]
    %v618 = vld [vmem:[#allocation8 + $0x1a8] sm:$0xff]
    %v619 = vld [vmem:[#allocation8 + $0x1b0] sm:$0xff]
    %v620 = vld [vmem:[#allocation8 + $0x1b8] sm:$0xff]
    %v621 = vld [vmem:[#allocation8 + $0x1c0] sm:$0xff]
    %v622 = vld [vmem:[#allocation8 + $0x1c8] sm:$0xff]
    %v623 = vld [vmem:[#allocation8 + $0x1d0] sm:$0xff]
    %v624 = vld [vmem:[#allocation8 + $0x1d8] sm:$0xff]
    %v625 = vld [vmem:[#allocation8 + $0x1e0] sm:$0xff]
    %v626 = vld [vmem:[#allocation8 + $0x1e8] sm:$0xff]
    %v627 = vld [vmem:[#allocation8 + $0x1f0] sm:$0xff]
    %v628 = vld [vmem:[#allocation8 + $0x1f8] sm:$0xff]
    %v629 = vld [vmem:[#allocation8 + $0x200] sm:$0xff]
    %v630 = vld [vmem:[#allocation8 + $0x208] sm:$0xff]
    %v631 = vld [vmem:[#allocation8 + $0x210] sm:$0xff]
    %v632 = vld [vmem:[#allocation8 + $0x218] sm:$0xff]
    %v633 = vld [vmem:[#allocation8 + $0x220] sm:$0xff]
    %v634 = vld [vmem:[#allocation8 + $0x228] sm:$0xff]
    %v635 = vld [vmem:[#allocation8 + $0x230] sm:$0xff]
    %v636 = vld [vmem:[#allocation8 + $0x238] sm:$0xff]
    %v637 = vld [vmem:[#allocation8 + $0x240] sm:$0xff]
    %v638 = vld [vmem:[#allocation8 + $0x248] sm:$0xff]
    %v639 = vld [vmem:[#allocation8 + $0x250] sm:$0xff]
    %v640 = vld [vmem:[#allocation8 + $0x258] sm:$0xff]
    %v641 = vld [vmem:[#allocation8 + $0x260] sm:$0xff]
    %v642 = vld [vmem:[#allocation8 + $0x268] sm:$0xff]
    %v643 = vld [vmem:[#allocation8 + $0x270] sm:$0xff]
    %v644 = vld [vmem:[#allocation8 + $0x278] sm:$0xff]
    %v645 = vld [vmem:[#allocation8 + $0x280] sm:$0xff]
    %v646 = vld [vmem:[#allocation8 + $0x288] sm:$0xff]
    %v647 = vld [vmem:[#allocation8 + $0x290] sm:$0xff]
    %v648 = vld [vmem:[#allocation8 + $0x298] sm:$0xff]
    %v649 = vld [vmem:[#allocation8 + $0x2a0] sm:$0xff]
    %v650 = vld [vmem:[#allocation8 + $0x2a8] sm:$0xff]
    %v651 = vld [vmem:[#allocation8 + $0x2b0] sm:$0xff]
    %v652 = vld [vmem:[#allocation8 + $0x2b8] sm:$0xff]
    %v653 = vld [vmem:[#allocation8 + $0x2c0] sm:$0xff]
    %v654 = vld [vmem:[#allocation8 + $0x2c8] sm:$0xff]
    %v655 = vld [vmem:[#allocation8 + $0x2d0] sm:$0xff]
    %v656 = vld [vmem:[#allocation8 + $0x2d8] sm:$0xff]
    %v657 = vld [vmem:[#allocation8 + $0x2e0] sm:$0xff]
    %v658 = vld [vmem:[#allocation8 + $0x2e8] sm:$0xff]
    %v659 = vld [vmem:[#allocation8 + $0x2f0] sm:$0xff]
    %v660 = vld [vmem:[#allocation8 + $0x2f8] sm:$0xff]
    %v661 = vld [vmem:[#allocation8 + $0x300] sm:$0xff]
    %v662 = vld [vmem:[#allocation8 + $0x308] sm:$0xff]
    %v663 = vld [vmem:[#allocation8 + $0x310] sm:$0xff]
    %v664 = vld [vmem:[#allocation8 + $0x318] sm:$0xff]
    %v665 = vld [vmem:[#allocation8 + $0x320] sm:$0xff]
    %v666 = vld [vmem:[#allocation8 + $0x328] sm:$0xff]
    %v667 = vld [vmem:[#allocation8 + $0x330] sm:$0xff]
    %v668 = vld [vmem:[#allocation8 + $0x338] sm:$0xff]
    %v669 = vld [vmem:[#allocation8 + $0x340] sm:$0xff]
    %v670 = vld [vmem:[#allocation8 + $0x348] sm:$0xff]
    %v671 = vld [vmem:[#allocation8 + $0x350] sm:$0xff]
    %v672 = vld [vmem:[#allocation8 + $0x358] sm:$0xff]
    %v673 = vld [vmem:[#allocation8 + $0x360] sm:$0xff]
    %v674 = vld [vmem:[#allocation8 + $0x368] sm:$0xff]
    %v675 = vld [vmem:[#allocation8 + $0x370] sm:$0xff]
    %v676 = vld [vmem:[#allocation8 + $0x378] sm:$0xff]
    %677 = vmatprep.subr.mxu0 0.0
    %678 = vmatpush1.msra.mxu0 %v565
    %679 = vmatprep.subr.mxu0 0.0
    %680 = vmatpush1.msra.mxu0 %v566
    %681 = vmatprep.subr.mxu0 0.0
    %682 = vmatpush1.msra.mxu0 %v567
    %683 = vmatprep.subr.mxu0 0.0
    %684 = vmatpush1.msra.mxu0 %v568
    %685 = vmatprep.subr.mxu0 0.0
    %686 = vmatpush1.msra.mxu0 %v569
    %687 = vmatprep.subr.mxu0 0.0
    %688 = vmatpush1.msra.mxu0 %v570
    %689 = vmatprep.subr.mxu0 0.0
    %690 = vmatpush1.msra.mxu0 %v571
    %691 = vmatprep.subr.mxu0 0.0
    %692 = vmatpush1.msra.mxu0 %v572
    %693 = vmatprep.subr.mxu0 0.0
    %694 = vmatpush1.msra.mxu0 %v573
    %695 = vmatprep.subr.mxu0 0.0
    %696 = vmatpush1.msra.mxu0 %v574
    %697 = vmatprep.subr.mxu0 0.0
    %698 = vmatpush1.msra.mxu0 %v575
    %699 = vmatprep.subr.mxu0 0.0
    %700 = vmatpush1.msra.mxu0 %v576
    %701 = vmatprep.subr.mxu0 0.0
    %702 = vmatpush1.msra.mxu0 %v577
    %703 = vmatprep.subr.mxu0 0.0
    %704 = vmatpush1.msra.mxu0 %v578
    %705 = vmatprep.subr.mxu0 0.0
    %706 = vmatpush1.msra.mxu0 %v579
    %707 = vmatprep.subr.mxu0 0.0
    %708 = vmatpush1.msra.mxu0 %v580
    %709 = vmatprep.subr.mxu0 0.0
    %710 = vmatpush1.msra.mxu0 %v581
    %711 = vmatprep.subr.mxu0 0.0
    %712 = vmatpush1.msra.mxu0 %v582
    %713 = vmatprep.subr.mxu0 0.0
    %714 = vmatpush1.msra.mxu0 %v583
    %715 = vmatprep.subr.mxu0 0.0
    %716 = vmatpush1.msra.mxu0 %v584
    %717 = vmatprep.subr.mxu0 0.0
    %718 = vmatpush1.msra.mxu0 %v585
    %719 = vmatprep.subr.mxu0 0.0
    %720 = vmatpush1.msra.mxu0 %v586
    %721 = vmatprep.subr.mxu0 0.0
    %722 = vmatpush1.msra.mxu0 %v587
    %723 = vmatprep.subr.mxu0 0.0
    %724 = vmatpush1.msra.mxu0 %v588
    %725 = vmatprep.subr.mxu0 0.0
    %726 = vmatpush1.msra.mxu0 %v589
    %727 = vmatprep.subr.mxu0 0.0
    %728 = vmatpush1.msra.mxu0 %v590
    %729 = vmatprep.subr.mxu0 0.0
    %730 = vmatpush1.msra.mxu0 %v591
    %731 = vmatprep.subr.mxu0 0.0
    %732 = vmatpush1.msra.mxu0 %v592
    %733 = vmatprep.subr.mxu0 0.0
    %734 = vmatpush1.msra.mxu0 %v593
    %735 = vmatprep.subr.mxu0 0.0
    %736 = vmatpush1.msra.mxu0 %v594
    %737 = vmatprep.subr.mxu0 0.0
    %738 = vmatpush1.msra.mxu0 %v595
    %739 = vmatprep.subr.mxu0 0.0
    %740 = vmatpush1.msra.mxu0 %v596
    %741 = vmatprep.mubr.f32.mxu0 %v553
    %742 = vmatmul.mubr.f32.gmra.mrb[0].mxu0 %v551
    %v743 = vpop.f32.mrb[0].mxu0
    %v744 = vadd.f32 0.0, %v743
    %v745 = vpop.f32.mrb[0].mxu0
    %746 = vdwg.mxu0
    %747 = vmatprep.subr.mxu0 0.0
    %748 = vmatpush1.msra.mxu0 %v597
    %749 = vmatprep.subr.mxu0 0.0
    %750 = vmatpush1.msra.mxu0 %v598
    %751 = vmatprep.subr.mxu0 0.0
    %752 = vmatpush1.msra.mxu0 %v599
    %753 = vmatprep.subr.mxu0 0.0
    %754 = vmatpush1.msra.mxu0 %v600
    %755 = vmatprep.subr.mxu0 0.0
    %756 = vmatpush1.msra.mxu0 %v601
    %757 = vmatprep.subr.mxu0 0.0
    %758 = vmatpush1.msra.mxu0 %v602
    %759 = vmatprep.subr.mxu0 0.0
    %760 = vmatpush1.msra.mxu0 %v603
    %761 = vmatprep.subr.mxu0 0.0
    %762 = vmatpush1.msra.mxu0 %v604
    %763 = vmatprep.subr.mxu0 0.0
    %764 = vmatpush1.msra.mxu0 %v605
    %765 = vmatprep.subr.mxu0 0.0
    %766 = vmatpush1.msra.mxu0 %v606
    %767 = vmatprep.subr.mxu0 0.0
    %768 = vmatpush1.msra.mxu0 %v607
    %769 = vmatprep.subr.mxu0 0.0
    %770 = vmatpush1.msra.mxu0 %v608
    %771 = vmatprep.subr.mxu0 0.0
    %772 = vmatpush1.msra.mxu0 %v609
    %773 = vmatprep.subr.mxu0 0.0
    %774 = vmatpush1.msra.mxu0 %v610
    %775 = vmatprep.subr.mxu0 0.0
    %776 = vmatpush1.msra.mxu0 %v611
    %777 = vmatprep.subr.mxu0 0.0
    %778 = vmatpush1.msra.mxu0 %v612
    %779 = vmatprep.subr.mxu0 0.0
    %780 = vmatpush1.msra.mxu0 %v613
    %781 = vmatprep.subr.mxu0 0.0
    %782 = vmatpush1.msra.mxu0 %v614
    %783 = vmatprep.subr.mxu0 0.0
    %784 = vmatpush1.msra.mxu0 %v615
    %785 = vmatprep.subr.mxu0 0.0
    %786 = vmatpush1.msra.mxu0 %v616
    %787 = vmatprep.subr.mxu0 0.0
    %788 = vmatpush1.msra.mxu0 %v617
    %789 = vmatprep.subr.mxu0 0.0
    %790 = vmatpush1.msra.mxu0 %v618
    %791 = vmatprep.subr.mxu0 0.0
    %792 = vmatpush1.msra.mxu0 %v619
    %793 = vmatprep.subr.mxu0 0.0
    %794 = vmatpush1.msra.mxu0 %v620
    %795 = vmatprep.subr.mxu0 0.0
    %796 = vmatpush1.msra.mxu0 %v621
    %797 = vmatprep.subr.mxu0 0.0
    %798 = vmatpush1.msra.mxu0 %v622
    %799 = vmatprep.subr.mxu0 0.0
    %800 = vmatpush1.msra.mxu0 %v623
    %801 = vmatprep.subr.mxu0 0.0
    %802 = vmatpush1.msra.mxu0 %v624
    %803 = vmatprep.subr.mxu0 0.0
    %804 = vmatpush1.msra.mxu0 %v625
    %805 = vmatprep.subr.mxu0 0.0
    %806 = vmatpush1.msra.mxu0 %v626
    %807 = vmatprep.subr.mxu0 0.0
    %808 = vmatpush1.msra.mxu0 %v627
    %809 = vmatprep.subr.mxu0 0.0
    %810 = vmatpush1.msra.mxu0 %v628
    %811 = vmatprep.mubr.f32.mxu0 %v557
    %812 = vmatmul.mubr.f32.gmra.mrb[0].mxu0 %v555
    %v813 = vpop.f32.mrb[0].mxu0
    %v814 = vadd.f32 %v744, %v813
    %v815 = vpop.f32.mrb[0].mxu0
    %816 = vdwg.mxu0
    %817 = vmatprep.subr.mxu0 0.0
    %818 = vmatpush1.msra.mxu0 %v629
    %819 = vmatprep.subr.mxu0 0.0
    %820 = vmatpush1.msra.mxu0 %v630
    %821 = vmatprep.subr.mxu0 0.0
    %822 = vmatpush1.msra.mxu0 %v631
    %823 = vmatprep.subr.mxu0 0.0
    %824 = vmatpush1.msra.mxu0 %v632
    %825 = vmatprep.subr.mxu0 0.0
    %826 = vmatpush1.msra.mxu0 %v633
    %827 = vmatprep.subr.mxu0 0.0
    %828 = vmatpush1.msra.mxu0 %v634
    %829 = vmatprep.subr.mxu0 0.0
    %830 = vmatpush1.msra.mxu0 %v635
    %831 = vmatprep.subr.mxu0 0.0
    %832 = vmatpush1.msra.mxu0 %v636
    %833 = vmatprep.subr.mxu0 0.0
    %834 = vmatpush1.msra.mxu0 %v637
    %835 = vmatprep.subr.mxu0 0.0
    %836 = vmatpush1.msra.mxu0 %v638
    %837 = vmatprep.subr.mxu0 0.0
    %838 = vmatpush1.msra.mxu0 %v639
    %839 = vmatprep.subr.mxu0 0.0
    %840 = vmatpush1.msra.mxu0 %v640
    %841 = vmatprep.subr.mxu0 0.0
    %842 = vmatpush1.msra.mxu0 %v641
    %843 = vmatprep.subr.mxu0 0.0
    %844 = vmatpush1.msra.mxu0 %v642
    %845 = vmatprep.subr.mxu0 0.0
    %846 = vmatpush1.msra.mxu0 %v643
    %847 = vmatprep.subr.mxu0 0.0
    %848 = vmatpush1.msra.mxu0 %v644
    %849 = vmatprep.subr.mxu0 0.0
    %850 = vmatpush1.msra.mxu0 %v645
    %851 = vmatprep.subr.mxu0 0.0
    %852 = vmatpush1.msra.mxu0 %v646
    %853 = vmatprep.subr.mxu0 0.0
    %854 = vmatpush1.msra.mxu0 %v647
    %855 = vmatprep.subr.mxu0 0.0
    %856 = vmatpush1.msra.mxu0 %v648
    %857 = vmatprep.subr.mxu0 0.0
    %858 = vmatpush1.msra.mxu0 %v649
    %859 = vmatprep.subr.mxu0 0.0
    %860 = vmatpush1.msra.mxu0 %v650
    %861 = vmatprep.subr.mxu0 0.0
    %862 = vmatpush1.msra.mxu0 %v651
    %863 = vmatprep.subr.mxu0 0.0
    %864 = vmatpush1.msra.mxu0 %v652
    %865 = vmatprep.subr.mxu0 0.0
    %866 = vmatpush1.msra.mxu0 %v653
    %867 = vmatprep.subr.mxu0 0.0
    %868 = vmatpush1.msra.mxu0 %v654
    %869 = vmatprep.subr.mxu0 0.0
    %870 = vmatpush1.msra.mxu0 %v655
    %871 = vmatprep.subr.mxu0 0.0
    %872 = vmatpush1.msra.mxu0 %v656
    %873 = vmatprep.subr.mxu0 0.0
    %874 = vmatpush1.msra.mxu0 %v657
    %875 = vmatprep.subr.mxu0 0.0
    %876 = vmatpush1.msra.mxu0 %v658
    %877 = vmatprep.subr.mxu0 0.0
    %878 = vmatpush1.msra.mxu0 %v659
    %879 = vmatprep.subr.mxu0 0.0
    %880 = vmatpush1.msra.mxu0 %v660
    %881 = vmatprep.mubr.f32.mxu0 %v561
    %882 = vmatmul.mubr.f32.gmra.mrb[0].mxu0 %v559
    %v883 = vpop.f32.mrb[0].mxu0
    %v884 = vadd.f32 %v814, %v883
    %v885 = vpop.f32.mrb[0].mxu0
    %886 = vdwg.mxu0
    %887 = vmatprep.subr.mxu0 0.0
    %888 = vmatpush1.msra.mxu0 %v661
    %889 = vmatprep.subr.mxu0 0.0
    %890 = vmatpush1.msra.mxu0 %v662
    %891 = vmatprep.subr.mxu0 0.0
    %892 = vmatpush1.msra.mxu0 %v663
    %893 = vmatprep.subr.mxu0 0.0
    %894 = vmatpush1.msra.mxu0 %v664
    %895 = vmatprep.subr.mxu0 0.0
    %896 = vmatpush1.msra.mxu0 %v665
    %897 = vmatprep.subr.mxu0 0.0
    %898 = vmatpush1.msra.mxu0 %v666
    %899 = vmatprep.subr.mxu0 0.0
    %900 = vmatpush1.msra.mxu0 %v667
    %901 = vmatprep.subr.mxu0 0.0
    %902 = vmatpush1.msra.mxu0 %v668
    %903 = vmatprep.subr.mxu0 0.0
    %904 = vmatpush1.msra.mxu0 %v669
    %905 = vmatprep.subr.mxu0 0.0
    %906 = vmatpush1.msra.mxu0 %v670
    %907 = vmatprep.subr.mxu0 0.0
    %908 = vmatpush1.msra.mxu0 %v671
    %909 = vmatprep.subr.mxu0 0.0
    %910 = vmatpush1.msra.mxu0 %v672
    %911 = vmatprep.subr.mxu0 0.0
    %912 = vmatpush1.msra.mxu0 %v673
    %913 = vmatprep.subr.mxu0 0.0
    %914 = vmatpush1.msra.mxu0 %v674
    %915 = vmatprep.subr.mxu0 0.0
    %916 = vmatpush1.msra.mxu0 %v675
    %917 = vmatprep.subr.mxu0 0.0
    %918 = vmatpush1.msra.mxu0 %v676
    %919 = vmatprep.subr.mxu0 0.0
    %920 = vmatpush1.msra.mxu0 0.0
    %921 = vmatprep.subr.mxu0 0.0
    %922 = vmatpush1.msra.mxu0 0.0
    %923 = vmatprep.subr.mxu0 0.0
    %924 = vmatpush1.msra.mxu0 0.0
    %925 = vmatprep.subr.mxu0 0.0
    %926 = vmatpush1.msra.mxu0 0.0
    %927 = vmatprep.subr.mxu0 0.0
    %928 = vmatpush1.msra.mxu0 0.0
    %929 = vmatprep.subr.mxu0 0.0
    %930 = vmatpush1.msra.mxu0 0.0
    %931 = vmatprep.subr.mxu0 0.0
    %932 = vmatpush1.msra.mxu0 0.0
    %933 = vmatprep.subr.mxu0 0.0
    %934 = vmatpush1.msra.mxu0 0.0
    %935 = vmatprep.subr.mxu0 0.0
    %936 = vmatpush1.msra.mxu0 0.0
    %937 = vmatprep.subr.mxu0 0.0
    %938 = vmatpush1.msra.mxu0 0.0
    %939 = vmatprep.subr.mxu0 0.0
    %940 = vmatpush1.msra.mxu0 0.0
    %941 = vmatprep.subr.mxu0 0.0
    %942 = vmatpush1.msra.mxu0 0.0
    %943 = vmatprep.subr.mxu0 0.0
    %944 = vmatpush1.msra.mxu0 0.0
    %945 = vmatprep.subr.mxu0 0.0
    %946 = vmatpush1.msra.mxu0 0.0
    %947 = vmatprep.subr.mxu0 0.0
    %948 = vmatpush1.msra.mxu0 0.0
    %949 = vmatprep.subr.mxu0 0.0
    %950 = vmatpush1.msra.mxu0 0.0
    %951 = vmatprep.mubr.f32.mxu0 0.0
    %952 = vmatmul.mubr.f32.gmra.mrb[0].mxu0 %v563
    %v953 = vpop.f32.mrb[0].mxu0
    %v954 = vadd.f32 %v884, %v953
    %v955 = vpop.f32.mrb[0].mxu0
    %956 = vdwg.mxu0
    %v957 = vadd.f32 %v564, %v954
    %958 = vst [vmem:[#allocation10] sm:$0x1] %v957
    // Predicated region
    $region38: #{forward.1} parent=1 // pred_check
      _
    $region39: #{forward.1} parent=1 // pred_check_branch
      %960 = sbr.rel (0) target = $region41
    $region40: #{forward.1} parent=1 // pred_region
      %s962 = ssub.s32 16, 16
      %963 = vsyncadd [#allocation4], %s962
      %s965 = sshll.u32 [#allocation10], 4
      %s966 = int_to_ptr.vmem [resolvable:$true] %s965
      %968 = dma.vmem_to_hbm [thread:$0]  %s966, 16, %s4, [#allocation4]
    $region41: #{forward.1} parent=1 // pred_fallthru
      _
    // Predicated region
    $region42: #{forward.1} parent=1 // pred_check
      _
    $region43: #{forward.1} parent=1 // pred_check_branch
      %970 = sbr.rel (0) target = $region45
    $region44: #{forward.1} parent=1 // pred_region
      %971 = dma.done [#allocation4], 16
    $region45: #{forward.1} parent=1 // pred_fallthru
      _
    %972 = vsyncpa [#allocation3], 1
    %973 = vsyncpa [#allocation6], 1
    %974 = vsyncpa [#allocation9], 1
    %975 = vsyncpa [#allocation4], 1

</llo_original>
